<compile_context>
chip_gen: v5e
topology: v5e:2x2
jax: 0.10.0
libtpu: 0.0.40
codegen_flags: <defaults>
</compile_context>

<pallas_src>
import jax
import jax.numpy as jnp
from jax.experimental import pallas as pl
from jax.experimental.pallas import tpu as pltpu


_AMAX_EPS = 1e-12  # amax==0 only for an all-zero input -> output is all zeros anyway


# ---------------------------------------------------------------------------
# helpers
# ---------------------------------------------------------------------------
def _vmem_capacity_bytes():
    """Physical VMEM of the current TPU generation (conservative 64 MiB fallback)."""
    try:
        cap = int(pltpu.get_tpu_info().vmem_capacity_bytes)
        if cap > 0:
            return cap
    except Exception:
        pass
    return 64 * 1024 * 1024


def _ceil_to(v, m):
    return -(-v // m) * m


def _pick_lane_dim(chw, max_l=1024):
    """Largest 128-multiple divisor of chw <= max_l (None if 128 does not divide chw)."""
    if chw % 128 != 0:
        return None
    best = 128
    d = 128
    lim = min(chw, max_l)
    while d <= lim:
        if chw % d == 0:
            best = d
        d += 128
    return best


def _pick_row_tile(r, l, itemsize, budget_bytes):
    """Rows per block so the (2, TS, L) input block stays under budget.
    Prefers multiples of 8 that divide R exactly (dense sublanes, exact grid)."""
    target = max(1, budget_bytes // (2 * l * itemsize))
    if r <= target:
        return r
    ts = (target // 8) * 8
    while ts >= 8:
        if r % ts == 0:
            return ts
        ts -= 8
    ts = min(target, r)
    while ts > 1:
        if r % ts == 0:
            return ts
        ts -= 1
    return 1


# ---------------------------------------------------------------------------
# kernels
# ---------------------------------------------------------------------------
def _fused_quant_split_kernel(x_ref, o0_ref, o1_ref):
    """Single-pass fast path: x resident in VMEM as (N, 2, R, L).
    Computes per-tensor amax, fake-quants, and writes the two channel halves."""
    n = x_ref.shape[0]
    # dynamic per-tensor amax; chunked per (batch, half) to bound f32 temporaries
    amax = jnp.float32(0.0)
    for b in range(n):
        for half in range(2):
            amax = jnp.maximum(
                amax, jnp.max(jnp.abs(x_ref[b, half].astype(jnp.float32))))
    scale = jnp.float32(127.0) / jnp.maximum(amax, jnp.float32(_AMAX_EPS))
    # halves processed sequentially: lower live-vreg pressure, earlier o0 writeback
    for b in range(n):
        x0 = x_ref[b, 0].astype(jnp.float32)
        o0_ref[b] = (jnp.round(x0 * scale) / scale).astype(o0_ref.dtype)
        x1 = x_ref[b, 1].astype(jnp.float32)
        o1_ref[b] = (jnp.round(x1 * scale) / scale).astype(o1_ref.dtype)


def _amax_partial_kernel(x_ref, pmax_ref, acc_ref):
    """Two-pass path, pass 1: per-batch partial amax.
    Hot loop is VPU-only (elementwise abs/max into a block-shaped accumulator);
    the single cross-lane reduce runs once per batch on its last row tile."""
    t = pl.program_id(1)

    @pl.when(t == 0)
    def _():
        acc_ref[...] = jnp.zeros_like(acc_ref)

    x = x_ref[...].astype(jnp.float32)                    # (1, 2, TS, L)
    acc_ref[...] = jnp.maximum(
        acc_ref[...], jnp.maximum(jnp.abs(x[0, 0]), jnp.abs(x[0, 1])))

    @pl.when(t == pl.num_programs(1) - 1)
    def _():
        pmax_ref[...] = jnp.max(acc_ref[...]).reshape(1, 1)


def _quant_split_kernel(scale_ref, x_ref, o0_ref, o1_ref):
    """Two-pass path, pass 2: fake-quant + fused channel split.
    scale (= 127/amax) is scalar-prefetched into SMEM."""
    scale = scale_ref[0]
    x0 = x_ref[0, 0].astype(jnp.float32)                  # (TS, L)
    o0_ref[0] = (jnp.round(x0 * scale) / scale).astype(o0_ref.dtype)
    x1 = x_ref[0, 1].astype(jnp.float32)
    o1_ref[0] = (jnp.round(x1 * scale) / scale).astype(o1_ref.dtype)


# ---------------------------------------------------------------------------
# wrappers
# ---------------------------------------------------------------------------
def _quant_c2f_two_pass(x4, n, r, l, itemsize, block_budget, vmem_limit, out_sds):
    ts = _pick_row_tile(r, l, itemsize, block_budget)
    grid = (n, r // ts)

    # ---- pass 1: per-batch partial amax ("parallel" batch axis -> v7x megacore) ----
    partials = pl.pallas_call(
        _amax_partial_kernel,
        out_shape=jax.ShapeDtypeStruct((n, 1), jnp.float32),
        grid_spec=pltpu.PrefetchScalarGridSpec(
            num_scalar_prefetch=0,
            grid=grid,
            in_specs=[pl.BlockSpec((1, 2, ts, l), lambda i, t: (i, 0, t, 0))],
            out_specs=pl.BlockSpec((1, 1), lambda i, t: (i, 0)),
            scratch_shapes=[pltpu.VMEM((ts, l), jnp.float32)],
        ),
        compiler_params=pltpu.CompilerParams(
            dimension_semantics=("parallel", "arbitrary"),
            vmem_limit_bytes=vmem_limit,
        ),
    )(x4)
    amax = jnp.max(partials)

    scale = jnp.float32(127.0) / jnp.maximum(amax, jnp.float32(_AMAX_EPS))
    scale = scale.reshape(1).astype(jnp.float32)

    # ---- pass 2: tiled fake-quant + fused channel split ----
    # (input BlockSpec could take pipeline_mode=pl.Buffered(3) if writeback DMAs
    #  contend with the prefetch; default double-buffering kept here)
    y0, y1 = pl.pallas_call(
        _quant_split_kernel,
        out_shape=(out_sds, out_sds),
        grid_spec=pltpu.PrefetchScalarGridSpec(
            num_scalar_prefetch=1,
            grid=grid,
            in_specs=[pl.BlockSpec((1, 2, ts, l), lambda i, t, s: (i, 0, t, 0))],
            out_specs=(pl.BlockSpec((1, ts, l), lambda i, t, s: (i, t, 0)),
                       pl.BlockSpec((1, ts, l), lambda i, t, s: (i, t, 0))),
        ),
        compiler_params=pltpu.CompilerParams(
            dimension_semantics=("parallel", "parallel"),
            vmem_limit_bytes=vmem_limit,
        ),
    )(scale, x4)
    return y0, y1


def quant_c2f_chunk(x, c, *, force_two_pass=False):
    """Per-tensor dynamic-amax signed 8-bit fake-quant of x (N, 2c, H, W), split
    along the channel dim into two (N, c, H, W) halves. Output dtype == input dtype."""
    n, cc, h, w = x.shape
    assert cc == 2 * c, "channel dim must be 2*c"
    chw = c * h * w
    itemsize = jnp.dtype(x.dtype).itemsize

    # Lane-dense layout: flatten each contiguous (batch, half) region to (R, L).
    l = _pick_lane_dim(chw)
    if l is None:
        # TODO(synk): c*H*W not 128-aligned; fall back to one full-width (lane-masked)
        # row per (batch, half); not tiled further along that row.
        l = chw
    r = chw // l

    x4 = x.reshape(n, 2, r, l)
    out_sds = jax.ShapeDtypeStruct((n, r, l), x.dtype)

    # Generation-aware budgets (v5e/v6e: 128 MiB VMEM, v7x: 64 MiB).
    vmem_cap = _vmem_capacity_bytes()
    big_vmem = vmem_cap >= 96 * 1024 * 1024
    block_budget = (8 if big_vmem else 4) * 1024 * 1024
    tiled_vmem_limit = (64 if big_vmem else 40) * 1024 * 1024

    # Padded VMEM footprint of the single-pass resident fast path.
    slab_pad = _ceil_to(r, 8) * _ceil_to(l, 128)          # one (batch, half) slab, elems
    resident = 2 * (n * 2 * slab_pad) * itemsize          # x + both outputs
    temporaries = 4 * slab_pad * 4                        # f32 temps of one slab's body
    fast_fits = (resident + temporaries) <= int(0.55 * vmem_cap)

    if fast_fits and not force_two_pass:
        fast_limit = max(32 * 1024 * 1024,
                         min(int(0.8 * vmem_cap),
                             resident + temporaries + 16 * 1024 * 1024))
        y0, y1 = pl.pallas_call(
            _fused_quant_split_kernel,
            out_shape=(out_sds, out_sds),
            in_specs=[pl.BlockSpec(memory_space=pltpu.MemorySpace.VMEM)],
            out_specs=(pl.BlockSpec(memory_space=pltpu.MemorySpace.VMEM),
                       pl.BlockSpec(memory_space=pltpu.MemorySpace.VMEM)),
            compiler_params=pltpu.CompilerParams(vmem_limit_bytes=fast_limit),
        )(x4)
    else:
        y0, y1 = _quant_c2f_two_pass(x4, n, r, l, itemsize,
                                     block_budget, tiled_vmem_limit, out_sds)

    return y0.reshape(n, c, h, w), y1.reshape(n, c, h, w)


class QuantC2fChunk:
    """JAX/Pallas equivalent of the PyTorch QuantC2fChunk module.

    forward(x, chunks, dims) == torch.split(fake_quant(x), (c, c), dims) with
    TensorQuantizer's default per-tensor signed 8-bit dynamic-amax path
    (no learned/calibrated parameters).
    """

    def __init__(self, c):
        self.c = c

    def __call__(self, x, chunks, dims):
        axis = dims % x.ndim
        # TODO(synk): only the NCHW channel split used by C2f (dims == 1) is fused
        # into the kernel; other split axes are not implemented.
        assert x.ndim == 4 and axis == 1, "fused kernel supports NCHW channel split"
        assert x.shape[1] == 2 * self.c
        return quant_c2f_chunk(x, self.c)


if __name__ == "__main__":
    key = jax.random.PRNGKey(0)
    c = 4
    N, C, H, W = 2, 2 * c, 16, 16  # C = 2*c so the split yields two (N, c, H, W) halves
    x = jax.random.normal(key, (N, C, H, W), dtype=jnp.float32)

    mod = QuantC2fChunk(c)
    y0, y1 = mod(x, chunks=2, dims=1)
    y0, y1 = jax.block_until_ready((y0, y1))

    # reference (pure JAX): per-tensor dynamic-amax signed 8-bit fake quant
    amax = jnp.max(jnp.abs(x))
    scale = 127.0 / amax
    ref = jnp.round(jnp.clip(x, -amax, amax) * scale) / scale

    def check(a, b):
        assert a.shape == (N, c, H, W) and b.shape == (N, c, H, W)
        assert a.dtype == x.dtype and b.dtype == x.dtype
        got = jnp.concatenate([a, b], axis=1)
        assert jnp.allclose(got, ref, atol=1e-5), float(jnp.max(jnp.abs(got - ref)))

    check(y0, y1)

    # also exercise the tiled two-pass fallback (used when x is too large for VMEM)
    z0, z1 = quant_c2f_chunk(x, c, force_two_pass=True)
    z0, z1 = jax.block_until_ready((z0, z1))
    check(z0, z1)

    print("KERNEL_OK")
</pallas_src>

<mosaic_0001>
module attributes {stable_mosaic.version = 11 : i64} {
  func.func @_fused_quant_split_kernel(%arg0: memref<2x2x1x1024xf32, #tpu.memory_space<vmem>>, %arg1: memref<2x1x1024xf32, #tpu.memory_space<vmem>>, %arg2: memref<2x1x1024xf32, #tpu.memory_space<vmem>>) attributes {dimension_semantics = [], scalar_prefetch = 0 : i64, scratch_operands = 0 : i64, tpu.core_type = #tpu.core_type<tc>} {
    %c0 = arith.constant 0 : index
    %c0_0 = arith.constant 0 : index
    %c0_1 = arith.constant 0 : index
    %c0_2 = arith.constant 0 : index
    %0 = vector.load %arg0[%c0, %c0_0, %c0_1, %c0_2] : memref<2x2x1x1024xf32, #tpu.memory_space<vmem>>, vector<1x1x1x1024xf32>
    %1 = vector.shape_cast %0 : vector<1x1x1x1024xf32> to vector<1x1024xf32>
    %2 = math.absf %1 : vector<1x1024xf32>
    %3 = vector.shape_cast %2 : vector<1x1024xf32> to vector<1x1x1024xf32>
    %cst = arith.constant dense<0xFF800000> : vector<1xf32>
    %4 = vector.multi_reduction <maximumf>, %3, %cst [1, 2] : vector<1x1x1024xf32> to vector<1xf32>
    %5 = vector.shape_cast %4 : vector<1xf32> to vector<1x1x1xf32>
    %6 = vector.extract %5[0, 0, 0] : f32 from vector<1x1x1xf32>
    %cst_3 = arith.constant 0.000000e+00 : f32
    %7 = arith.maximumf %cst_3, %6 : f32
    %c0_4 = arith.constant 0 : index
    %c1 = arith.constant 1 : index
    %c0_5 = arith.constant 0 : index
    %c0_6 = arith.constant 0 : index
    %8 = vector.load %arg0[%c0_4, %c1, %c0_5, %c0_6] : memref<2x2x1x1024xf32, #tpu.memory_space<vmem>>, vector<1x1x1x1024xf32>
    %9 = vector.shape_cast %8 : vector<1x1x1x1024xf32> to vector<1x1024xf32>
    %10 = math.absf %9 : vector<1x1024xf32>
    %11 = vector.shape_cast %10 : vector<1x1024xf32> to vector<1x1x1024xf32>
    %cst_7 = arith.constant dense<0xFF800000> : vector<1xf32>
    %12 = vector.multi_reduction <maximumf>, %11, %cst_7 [1, 2] : vector<1x1x1024xf32> to vector<1xf32>
    %13 = vector.shape_cast %12 : vector<1xf32> to vector<1x1x1xf32>
    %14 = vector.extract %13[0, 0, 0] : f32 from vector<1x1x1xf32>
    %15 = arith.maximumf %7, %14 : f32
    %c1_8 = arith.constant 1 : index
    %c0_9 = arith.constant 0 : index
    %c0_10 = arith.constant 0 : index
    %c0_11 = arith.constant 0 : index
    %16 = vector.load %arg0[%c1_8, %c0_9, %c0_10, %c0_11] : memref<2x2x1x1024xf32, #tpu.memory_space<vmem>>, vector<1x1x1x1024xf32>
    %17 = vector.shape_cast %16 : vector<1x1x1x1024xf32> to vector<1x1024xf32>
    %18 = math.absf %17 : vector<1x1024xf32>
    %19 = vector.shape_cast %18 : vector<1x1024xf32> to vector<1x1x1024xf32>
    %cst_12 = arith.constant dense<0xFF800000> : vector<1xf32>
    %20 = vector.multi_reduction <maximumf>, %19, %cst_12 [1, 2] : vector<1x1x1024xf32> to vector<1xf32>
    %21 = vector.shape_cast %20 : vector<1xf32> to vector<1x1x1xf32>
    %22 = vector.extract %21[0, 0, 0] : f32 from vector<1x1x1xf32>
    %23 = arith.maximumf %15, %22 : f32
    %c1_13 = arith.constant 1 : index
    %c1_14 = arith.constant 1 : index
    %c0_15 = arith.constant 0 : index
    %c0_16 = arith.constant 0 : index
    %24 = vector.load %arg0[%c1_13, %c1_14, %c0_15, %c0_16] : memref<2x2x1x1024xf32, #tpu.memory_space<vmem>>, vector<1x1x1x1024xf32>
    %25 = vector.shape_cast %24 : vector<1x1x1x1024xf32> to vector<1x1024xf32>
    %26 = math.absf %25 : vector<1x1024xf32>
    %27 = vector.shape_cast %26 : vector<1x1024xf32> to vector<1x1x1024xf32>
    %cst_17 = arith.constant dense<0xFF800000> : vector<1xf32>
    %28 = vector.multi_reduction <maximumf>, %27, %cst_17 [1, 2] : vector<1x1x1024xf32> to vector<1xf32>
    %29 = vector.shape_cast %28 : vector<1xf32> to vector<1x1x1xf32>
    %30 = vector.extract %29[0, 0, 0] : f32 from vector<1x1x1xf32>
    %31 = arith.maximumf %23, %30 : f32
    %cst_18 = arith.constant 9.99999996E-13 : f32
    %32 = arith.maximumf %31, %cst_18 : f32
    %cst_19 = arith.constant 1.270000e+02 : f32
    %33 = arith.divf %cst_19, %32 : f32
    %c0_20 = arith.constant 0 : index
    %c0_21 = arith.constant 0 : index
    %c0_22 = arith.constant 0 : index
    %c0_23 = arith.constant 0 : index
    %34 = vector.load %arg0[%c0_20, %c0_21, %c0_22, %c0_23] : memref<2x2x1x1024xf32, #tpu.memory_space<vmem>>, vector<1x1x1x1024xf32>
    %35 = vector.shape_cast %34 : vector<1x1x1x1024xf32> to vector<1x1024xf32>
    %36 = vector.broadcast %33 : f32 to vector<1x1024xf32>
    %37 = arith.mulf %35, %36 : vector<1x1024xf32>
    %38 = math.roundeven %37 : vector<1x1024xf32>
    %39 = vector.broadcast %33 : f32 to vector<1x1024xf32>
    %40 = arith.divf %38, %39 : vector<1x1024xf32>
    %c0_24 = arith.constant 0 : index
    %c0_25 = arith.constant 0 : index
    %c0_26 = arith.constant 0 : index
    %41 = vector.load %arg1[%c0_24, %c0_25, %c0_26] : memref<2x1x1024xf32, #tpu.memory_space<vmem>>, vector<1x1x1024xf32>
    %42 = vector.shape_cast %41 : vector<1x1x1024xf32> to vector<1x1024xf32>
    %43 = vector.shape_cast %40 : vector<1x1024xf32> to vector<1x1x1024xf32>
    tpu.vector_store %arg1[%c0_24, %c0_25, %c0_26], %43 {strides = array<i32>} : memref<2x1x1024xf32, #tpu.memory_space<vmem>>, vector<1x1x1024xf32>,
    %c0_27 = arith.constant 0 : index
    %c1_28 = arith.constant 1 : index
    %c0_29 = arith.constant 0 : index
    %c0_30 = arith.constant 0 : index
    %44 = vector.load %arg0[%c0_27, %c1_28, %c0_29, %c0_30] : memref<2x2x1x1024xf32, #tpu.memory_space<vmem>>, vector<1x1x1x1024xf32>
    %45 = vector.shape_cast %44 : vector<1x1x1x1024xf32> to vector<1x1024xf32>
    %46 = vector.broadcast %33 : f32 to vector<1x1024xf32>
    %47 = arith.mulf %45, %46 : vector<1x1024xf32>
    %48 = math.roundeven %47 : vector<1x1024xf32>
    %49 = vector.broadcast %33 : f32 to vector<1x1024xf32>
    %50 = arith.divf %48, %49 : vector<1x1024xf32>
    %c0_31 = arith.constant 0 : index
    %c0_32 = arith.constant 0 : index
    %c0_33 = arith.constant 0 : index
    %51 = vector.load %arg2[%c0_31, %c0_32, %c0_33] : memref<2x1x1024xf32, #tpu.memory_space<vmem>>, vector<1x1x1024xf32>
    %52 = vector.shape_cast %51 : vector<1x1x1024xf32> to vector<1x1024xf32>
    %53 = vector.shape_cast %50 : vector<1x1024xf32> to vector<1x1x1024xf32>
    tpu.vector_store %arg2[%c0_31, %c0_32, %c0_33], %53 {strides = array<i32>} : memref<2x1x1024xf32, #tpu.memory_space<vmem>>, vector<1x1x1024xf32>,
    %c1_34 = arith.constant 1 : index
    %c0_35 = arith.constant 0 : index
    %c0_36 = arith.constant 0 : index
    %c0_37 = arith.constant 0 : index
    %54 = vector.load %arg0[%c1_34, %c0_35, %c0_36, %c0_37] : memref<2x2x1x1024xf32, #tpu.memory_space<vmem>>, vector<1x1x1x1024xf32>
    %55 = vector.shape_cast %54 : vector<1x1x1x1024xf32> to vector<1x1024xf32>
    %56 = vector.broadcast %33 : f32 to vector<1x1024xf32>
    %57 = arith.mulf %55, %56 : vector<1x1024xf32>
    %58 = math.roundeven %57 : vector<1x1024xf32>
    %59 = vector.broadcast %33 : f32 to vector<1x1024xf32>
    %60 = arith.divf %58, %59 : vector<1x1024xf32>
    %c1_38 = arith.constant 1 : index
    %c0_39 = arith.constant 0 : index
    %c0_40 = arith.constant 0 : index
    %61 = vector.load %arg1[%c1_38, %c0_39, %c0_40] : memref<2x1x1024xf32, #tpu.memory_space<vmem>>, vector<1x1x1024xf32>
    %62 = vector.shape_cast %61 : vector<1x1x1024xf32> to vector<1x1024xf32>
    %63 = vector.shape_cast %60 : vector<1x1024xf32> to vector<1x1x1024xf32>
    tpu.vector_store %arg1[%c1_38, %c0_39, %c0_40], %63 {strides = array<i32>} : memref<2x1x1024xf32, #tpu.memory_space<vmem>>, vector<1x1x1024xf32>,
    %c1_41 = arith.constant 1 : index
    %c1_42 = arith.constant 1 : index
    %c0_43 = arith.constant 0 : index
    %c0_44 = arith.constant 0 : index
    %64 = vector.load %arg0[%c1_41, %c1_42, %c0_43, %c0_44] : memref<2x2x1x1024xf32, #tpu.memory_space<vmem>>, vector<1x1x1x1024xf32>
    %65 = vector.shape_cast %64 : vector<1x1x1x1024xf32> to vector<1x1024xf32>
    %66 = vector.broadcast %33 : f32 to vector<1x1024xf32>
    %67 = arith.mulf %65, %66 : vector<1x1024xf32>
    %68 = math.roundeven %67 : vector<1x1024xf32>
    %69 = vector.broadcast %33 : f32 to vector<1x1024xf32>
    %70 = arith.divf %68, %69 : vector<1x1024xf32>
    %c1_45 = arith.constant 1 : index
    %c0_46 = arith.constant 0 : index
    %c0_47 = arith.constant 0 : index
    %71 = vector.load %arg2[%c1_45, %c0_46, %c0_47] : memref<2x1x1024xf32, #tpu.memory_space<vmem>>, vector<1x1x1024xf32>
    %72 = vector.shape_cast %71 : vector<1x1x1024xf32> to vector<1x1024xf32>
    %73 = vector.shape_cast %70 : vector<1x1024xf32> to vector<1x1x1024xf32>
    tpu.vector_store %arg2[%c1_45, %c0_46, %c0_47], %73 {strides = array<i32>} : memref<2x1x1024xf32, #tpu.memory_space<vmem>>, vector<1x1x1024xf32>,
    return
  }
}

</mosaic_0001>

<llo_original>
// kernel: tpu_custom_call.1
$region0: #{tpu_custom_call.1}
  #allocation0 [shape = 'u32[]', space=smem, size = 0x4, offset = 0x4, fixed_abs, tag = 'smem constant byte address 0x4 - core index']
  #allocation1 [shape = 'u32[72,128]{1,0:T(1,128)}', space=vmem, size = 0x9000, scoped, tag = 'internal scratch']
  %s0 = inlined_call_operand.hbm [shape: f32[2,2,1,1024], index: 0, kind: input, shape index: {}]
  %s1 = inlined_call_operand.hbm [shape: f32[2,1,1024], index: 1, kind: output, shape index: {0}]
  %s2 = inlined_call_operand.hbm [shape: f32[2,1,1024], index: 2, kind: output, shape index: {1}]
  %3 = xla_tuple %s1, %s2
  %s4 = sld [smem:[#allocation0]]
  $region26: #{tpu_custom_call.1} parent=0
    _
  %s6 = ssub.s32 1, %s4
  %s7 = scalar_select 0, %s6, %s4
  $region1: #{tpu_custom_call.1} parent=0
    #allocation2 [shape = 'u8[16384]{0}', space=vmem, size = 0x4000, scoped, tag = 'input window, operand 0, single buffered']
    #allocation3 [shape = 's32[1]{0}', space=sflag, size = 0x4, scoped, tag = 'scoped memory for tpu_custom_call.1']
    #allocation4 [shape = 's32[1]{0}', space=sflag, size = 0x4, scoped, tag = 'scoped memory for tpu_custom_call.1']
    #allocation5 [shape = 'u8[8192]{0}', space=vmem, size = 0x2000, scoped, tag = 'output window, operand 0, single buffered']
    #allocation6 [shape = 'u8[8192]{0}', space=vmem, size = 0x2000, scoped, tag = 'output window, operand 1, single buffered']
    #allocation7 [shape = 's32[1]{0}', space=sflag, size = 0x4, scoped, tag = 'scoped memory for tpu_custom_call.1']
    %8 = vsyncpa [#allocation3], 0
    %9 = vsyncpa [#allocation4], 0
    %10 = vsyncpa [#allocation7], 0
    // Predicated region
    $region2: #{tpu_custom_call.1} parent=1 // pred_check
      _
    $region3: #{tpu_custom_call.1} parent=1 // pred_check_branch
      %12 = sbr.rel (0) target = $region5
    $region4: #{tpu_custom_call.1} parent=1 // pred_region
      %14 = vsyncadd [#allocation3], 0
      %s15 = sshll.u32 %s0, 4
      %s16 = int_to_ptr.hbm [resolvable:$true] %s15
      %s17 = sshll.u32 [#allocation2], 4
      %s18 = int_to_ptr.vmem [resolvable:$true] %s17
      %23 = dma.hbm_to_vmem [thread:$0]  %s16, 512, %s18, [#allocation3], 128, 128, 8
    $region5: #{tpu_custom_call.1} parent=1 // pred_fallthru
      _
    // Predicated region
    $region6: #{tpu_custom_call.1} parent=1 // pred_check
      _
    $region7: #{tpu_custom_call.1} parent=1 // pred_check_branch
      %25 = sbr.rel (0) target = $region9
    $region8: #{tpu_custom_call.1} parent=1 // pred_region
      %27 = dma.done [#allocation3], 512
    $region9: #{tpu_custom_call.1} parent=1 // pred_fallthru
      _
    %v28 = vld [vmem:[#allocation2] sm:$0xff]
    %v29 = vand.u32 2147483647, %v28
    %v31 = vperm.slane %v29, 0
    %v32 = vperm.slane %v29, 1
    %v33 = vperm.slane %v29, 2
    %v34 = vperm.slane %v29, 3
    %v35 = vperm.slane %v29, 4
    %v36 = vperm.slane %v29, 5
    %v37 = vperm.slane %v29, 6
    %v38 = vperm.slane %v29, 7
    %vm47 = vcmask 1040384
    %v48 = vsel %vm47, %v31, -inf
    %v49 = vsel %vm47, %v32, -inf
    %v50 = vsel %vm47, %v33, -inf
    %v51 = vsel %vm47, %v34, -inf
    %v52 = vsel %vm47, %v35, -inf
    %v53 = vmax.f32 %v48, %v52
    %v54 = vsel %vm47, %v36, -inf
    %v55 = vmax.f32 %v49, %v54
    %v56 = vsel %vm47, %v37, -inf
    %v57 = vmax.f32 %v50, %v56
    %v58 = vsel %vm47, %v38, -inf
    %v59 = vmax.f32 %v51, %v58
    %v60 = vmax.f32 %v53, %v55
    %v61 = vmax.f32 %v57, %v59
    %v62 = vmax.f32 %v60, %v61
    %63 = vmax.xlane.f32.xlu0 %v62
    %v64 = vpop.xlane.xlu0 %63
    %v65 = vrot.slane %v64, 4
    %v66 = vmax.f32 %v64, %v65
    %v67 = vrot.slane %v66, 2
    %v68 = vmax.f32 %v66, %v67
    %v69 = vrot.slane %v68, 1
    %v70 = vmax.f32 %v68, %v69
    %s71 = vtos %v70
    %s72 = smax.f32 %s71, 0.0
    %s73 = scalar_lea.vmem [#allocation2], 8
    %v74 = vld [vmem:[%s73] sm:$0xff]
    %v75 = vand.u32 2147483647, %v74
    %v77 = vperm.slane %v75, 0
    %v78 = vperm.slane %v75, 1
    %v79 = vperm.slane %v75, 2
    %v80 = vperm.slane %v75, 3
    %v81 = vperm.slane %v75, 4
    %v82 = vperm.slane %v75, 5
    %v83 = vperm.slane %v75, 6
    %v84 = vperm.slane %v75, 7
    %v93 = vsel %vm47, %v77, -inf
    %v94 = vsel %vm47, %v78, -inf
    %v95 = vsel %vm47, %v79, -inf
    %v96 = vsel %vm47, %v80, -inf
    %v97 = vsel %vm47, %v81, -inf
    %v98 = vmax.f32 %v93, %v97
    %v99 = vsel %vm47, %v82, -inf
    %v100 = vmax.f32 %v94, %v99
    %v101 = vsel %vm47, %v83, -inf
    %v102 = vmax.f32 %v95, %v101
    %v103 = vsel %vm47, %v84, -inf
    %v104 = vmax.f32 %v96, %v103
    %v105 = vmax.f32 %v98, %v100
    %v106 = vmax.f32 %v102, %v104
    %v107 = vmax.f32 %v105, %v106
    %108 = vmax.xlane.f32.xlu0 %v107
    %v109 = vpop.xlane.xlu0 %108
    %v110 = vrot.slane %v109, 4
    %v111 = vmax.f32 %v109, %v110
    %v112 = vrot.slane %v111, 2
    %v113 = vmax.f32 %v111, %v112
    %v114 = vrot.slane %v113, 1
    %v115 = vmax.f32 %v113, %v114
    %s116 = vtos %v115
    %s117 = smax.f32 %s72, %s116
    %s118 = scalar_lea.vmem [#allocation2], 16
    %v119 = vld [vmem:[%s118] sm:$0xff]
    %v120 = vand.u32 2147483647, %v119
    %v122 = vperm.slane %v120, 0
    %v123 = vperm.slane %v120, 1
    %v124 = vperm.slane %v120, 2
    %v125 = vperm.slane %v120, 3
    %v126 = vperm.slane %v120, 4
    %v127 = vperm.slane %v120, 5
    %v128 = vperm.slane %v120, 6
    %v129 = vperm.slane %v120, 7
    %v138 = vsel %vm47, %v122, -inf
    %v139 = vsel %vm47, %v123, -inf
    %v140 = vsel %vm47, %v124, -inf
    %v141 = vsel %vm47, %v125, -inf
    %v142 = vsel %vm47, %v126, -inf
    %v143 = vmax.f32 %v138, %v142
    %v144 = vsel %vm47, %v127, -inf
    %v145 = vmax.f32 %v139, %v144
    %v146 = vsel %vm47, %v128, -inf
    %v147 = vmax.f32 %v140, %v146
    %v148 = vsel %vm47, %v129, -inf
    %v149 = vmax.f32 %v141, %v148
    %v150 = vmax.f32 %v143, %v145
    %v151 = vmax.f32 %v147, %v149
    %v152 = vmax.f32 %v150, %v151
    %153 = vmax.xlane.f32.xlu0 %v152
    %v154 = vpop.xlane.xlu0 %153
    %v155 = vrot.slane %v154, 4
    %v156 = vmax.f32 %v154, %v155
    %v157 = vrot.slane %v156, 2
    %v158 = vmax.f32 %v156, %v157
    %v159 = vrot.slane %v158, 1
    %v160 = vmax.f32 %v158, %v159
    %s161 = vtos %v160
    %s162 = smax.f32 %s117, %s161
    %s163 = scalar_lea.vmem [#allocation2], 24
    %v164 = vld [vmem:[%s163] sm:$0xff]
    %v165 = vand.u32 2147483647, %v164
    %v167 = vperm.slane %v165, 0
    %v168 = vperm.slane %v165, 1
    %v169 = vperm.slane %v165, 2
    %v170 = vperm.slane %v165, 3
    %v171 = vperm.slane %v165, 4
    %v172 = vperm.slane %v165, 5
    %v173 = vperm.slane %v165, 6
    %v174 = vperm.slane %v165, 7
    %v183 = vsel %vm47, %v167, -inf
    %v184 = vsel %vm47, %v168, -inf
    %v185 = vsel %vm47, %v169, -inf
    %v186 = vsel %vm47, %v170, -inf
    %v187 = vsel %vm47, %v171, -inf
    %v188 = vmax.f32 %v183, %v187
    %v189 = vsel %vm47, %v172, -inf
    %v190 = vmax.f32 %v184, %v189
    %v191 = vsel %vm47, %v173, -inf
    %v192 = vmax.f32 %v185, %v191
    %v193 = vsel %vm47, %v174, -inf
    %v194 = vmax.f32 %v186, %v193
    %v195 = vmax.f32 %v188, %v190
    %v196 = vmax.f32 %v192, %v194
    %v197 = vmax.f32 %v195, %v196
    %198 = vmax.xlane.f32.xlu0 %v197
    %v199 = vpop.xlane.xlu0 %198
    %v200 = vrot.slane %v199, 4
    %v201 = vmax.f32 %v199, %v200
    %v202 = vrot.slane %v201, 2
    %v203 = vmax.f32 %v201, %v202
    %v204 = vrot.slane %v203, 1
    %v205 = vmax.f32 %v203, %v204
    %s206 = vtos %v205
    %s207 = smax.f32 %s162, %s206
    %s208 = smax.f32 %s207, 1e-12
    %v209 = vstv %s208
    %v210 = vrcp.pop %v209
    %v211 = vmul.f32 %v209, %v210
    %v212 = vsub.f32 1.0, %v211
    %v213 = vmul.f32 %v210, %v212
    %v214 = vadd.f32 %v210, %v213
    %vm215 = vweird.f32 %v209
    %vm216 = vweird.f32 %v210
    %vm217 = vmor %vm215, %vm216
    %v218 = vsel %vm217, %v210, %v214
    %v219 = vand.u32 2147483647, %v209
    %vm220 = vcmp.eq.f32.partialorder %v219, 8.507059e+37
    %v221 = vand.u32 %v209, 2147483648
    %v222 = vor.u32 1.1754944e-38, %v221
    %v223 = vsel %vm220, %v222, %v218
    %s224 = vtos %v223
    %s225 = smul.f32 127.0, %s224
    %v226 = vstv %s225
    %v227 = vmul.f32 %v28, %v226
    %v228 = vround.ne.pseudo %v227
    %v229 = vrcp.pop %v226
    %v230 = vmul.f32 %v226, %v229
    %v231 = vsub.f32 1.0, %v230
    %v232 = vmul.f32 %v229, %v231
    %v233 = vadd.f32 %v229, %v232
    %vm234 = vweird.f32 %v226
    %vm235 = vweird.f32 %v229
    %vm236 = vmor %vm234, %vm235
    %v237 = vsel %vm236, %v229, %v233
    %v238 = vand.u32 2147483647, %v226
    %vm239 = vcmp.eq.f32.partialorder %v238, 8.507059e+37
    %v240 = vand.u32 %v226, 2147483648
    %v241 = vor.u32 1.1754944e-38, %v240
    %v242 = vsel %vm239, %v241, %v237
    %v243 = vmul.f32 %v228, %v242
    %244 = vst [vmem:[#allocation5] sm:$0xff] %v243
    %v245 = vld [vmem:[%s73] sm:$0xff]
    %v246 = vmul.f32 %v245, %v226
    %v247 = vround.ne.pseudo %v246
    %v248 = vmul.f32 %v247, %v242
    %249 = vst [vmem:[#allocation6] sm:$0xff] %v248
    %v250 = vld [vmem:[%s118] sm:$0xff]
    %v251 = vmul.f32 %v250, %v226
    %v252 = vround.ne.pseudo %v251
    %v253 = vmul.f32 %v252, %v242
    %s254 = scalar_lea.vmem [#allocation5], 8
    %255 = vst [vmem:[%s254] sm:$0xff] %v253
    %v256 = vld [vmem:[%s163] sm:$0xff]
    %v257 = vmul.f32 %v256, %v226
    %v258 = vround.ne.pseudo %v257
    %v259 = vmul.f32 %v258, %v242
    %s260 = scalar_lea.vmem [#allocation6], 8
    %261 = vst [vmem:[%s260] sm:$0xff] %v259
    // Predicated region
    $region10: #{tpu_custom_call.1} parent=1 // pred_check
      _
    $region11: #{tpu_custom_call.1} parent=1 // pred_check_branch
      %263 = sbr.rel (0) target = $region13
    $region12: #{tpu_custom_call.1} parent=1 // pred_region
      %265 = vsyncadd [#allocation4], 0
      %s266 = sshll.u32 [#allocation5], 4
      %s267 = int_to_ptr.vmem [resolvable:$true] %s266
      %s268 = sshll.u32 %s1, 4
      %s269 = int_to_ptr.hbm [resolvable:$true] %s268
      %274 = dma.vmem_to_hbm [thread:$0]  %s267, 256, %s269, [#allocation4], 128, 128, 8
    $region13: #{tpu_custom_call.1} parent=1 // pred_fallthru
      _
    // Predicated region
    $region14: #{tpu_custom_call.1} parent=1 // pred_check
      _
    $region15: #{tpu_custom_call.1} parent=1 // pred_check_branch
      %276 = sbr.rel (0) target = $region17
    $region16: #{tpu_custom_call.1} parent=1 // pred_region
      %278 = vsyncadd [#allocation7], 0
      %s279 = sshll.u32 [#allocation6], 4
      %s280 = int_to_ptr.vmem [resolvable:$true] %s279
      %s281 = sshll.u32 %s2, 4
      %s282 = int_to_ptr.hbm [resolvable:$true] %s281
      %287 = dma.vmem_to_hbm [thread:$0]  %s280, 256, %s282, [#allocation7], 128, 128, 8
    $region17: #{tpu_custom_call.1} parent=1 // pred_fallthru
      _
    // Predicated region
    $region18: #{tpu_custom_call.1} parent=1 // pred_check
      _
    $region19: #{tpu_custom_call.1} parent=1 // pred_check_branch
      %289 = sbr.rel (0) target = $region21
    $region20: #{tpu_custom_call.1} parent=1 // pred_region
      %291 = dma.done [#allocation4], 256
    $region21: #{tpu_custom_call.1} parent=1 // pred_fallthru
      _
    // Predicated region
    $region22: #{tpu_custom_call.1} parent=1 // pred_check
      _
    $region23: #{tpu_custom_call.1} parent=1 // pred_check_branch
      %293 = sbr.rel (0) target = $region25
    $region24: #{tpu_custom_call.1} parent=1 // pred_region
      %295 = dma.done [#allocation7], 256
    $region25: #{tpu_custom_call.1} parent=1 // pred_fallthru
      _
    %296 = vsyncpa [#allocation3], 1
    %297 = vsyncpa [#allocation4], 1
    %298 = vsyncpa [#allocation7], 1

</llo_original>
